<compile_context>
chip_gen: v5e
topology: v5e:2x2
jax: 0.10.0
libtpu: 0.0.40
codegen_flags: <defaults>
</compile_context>

<pallas_src>
import functools

import jax
import jax.numpy as jnp
from jax import lax
from jax.experimental import pallas as pl
from jax.experimental.pallas import tpu as pltpu

_NEG_SLOPE = 0.2   # LeakyReLU negative slope from the PyTorch module
_EPS = 1e-5        # InstanceNorm2d default eps


def _round_up(a, b):
    return (a + b - 1) // b * b


# ---------------------------------------------------------------------------
# Kernel 1: conv-as-GEMM (im2col patches @ reshaped weight) + fused LeakyReLU.
# ---------------------------------------------------------------------------
def _conv_gemm_kernel(lhs_ref, rhs_ref, out_ref, acc_ref, *, apply_relu):
    k = pl.program_id(2)

    @pl.when(k == 0)
    def _():
        acc_ref[...] = jnp.zeros_like(acc_ref)

    acc_ref[...] += jnp.dot(lhs_ref[...], rhs_ref[...],
                            preferred_element_type=jnp.float32)

    @pl.when(k == pl.num_programs(2) - 1)
    def _():
        y = acc_ref[...]
        if apply_relu:
            y = jnp.where(y >= 0.0, y, _NEG_SLOPE * y)   # LeakyReLU(0.2)
        out_ref[...] = y.astype(out_ref.dtype)


def _conv3x3_s2(x_nchw, weight, *, apply_relu, tm=256, tk=128, tn=128):
    """3x3 / stride-2 / pad-1 / bias-free conv (+ optional fused LeakyReLU).

    x_nchw: (N, C_in, H, W) f32.  weight: (C_out, C_in, 3, 3) f32 (PyTorch layout).
    Returns (N, C_out, H_out, W_out).
    """
    N, C_in, H, W = x_nchw.shape
    C_out = weight.shape[0]
    stride = 2
    H_out = (H + 2 - 3) // stride + 1
    W_out = (W + 2 - 3) // stride + 1

    # --- im2col (layout plumbing only; the matmul runs in the Pallas kernel) ---
    x_nhwc = jnp.transpose(x_nchw, (0, 2, 3, 1))
    x_pad = jnp.pad(x_nhwc, ((0, 0), (1, 1), (1, 1), (0, 0)))
    taps = []
    for kh in range(3):
        for kw in range(3):
            taps.append(
                lax.slice(
                    x_pad,
                    (0, kh, kw, 0),
                    (N, kh + stride * (H_out - 1) + 1,
                     kw + stride * (W_out - 1) + 1, C_in),
                    (1, stride, stride, 1)))
    patches = jnp.concatenate(taps, axis=-1)            # (N, Ho, Wo, 9*C_in)

    M = N * H_out * W_out
    K = 9 * C_in
    lhs = patches.reshape(M, K)
    # rhs[(kh*3 + kw)*C_in + c, o] == weight[o, c, kh, kw]
    rhs = jnp.transpose(weight, (2, 3, 1, 0)).reshape(K, C_out)

    # --- pad to tile-aligned, lane-dense shapes (zeros are inert in the GEMM) ---
    tm = min(tm, _round_up(M, 8))
    M_p = _round_up(M, tm)
    K_p = _round_up(K, tk)
    N_p = _round_up(C_out, tn)
    lhs_p = jnp.pad(lhs, ((0, M_p - M), (0, K_p - K)))
    rhs_p = jnp.pad(rhs, ((0, K_p - K), (0, N_p - C_out)))

    grid = (M_p // tm, N_p // tn, K_p // tk)
    kernel = functools.partial(_conv_gemm_kernel, apply_relu=apply_relu)

    out_p = pl.pallas_call(
        kernel,
        out_shape=jax.ShapeDtypeStruct((M_p, N_p), x_nchw.dtype),
        grid_spec=pltpu.PrefetchScalarGridSpec(
            num_scalar_prefetch=0,
            grid=grid,
            in_specs=[pl.BlockSpec((tm, tk), lambda i, j, k: (i, k)),
                      pl.BlockSpec((tk, tn), lambda i, j, k: (k, j))],
            out_specs=pl.BlockSpec((tm, tn), lambda i, j, k: (i, j)),
            scratch_shapes=[pltpu.VMEM((tm, tn), jnp.float32)]),
        compiler_params=pltpu.CompilerParams(
            dimension_semantics=("parallel", "parallel", "arbitrary"),
            vmem_limit_bytes=32 * 1024 * 1024),
        cost_estimate=pl.CostEstimate(
            flops=2 * M_p * K_p * N_p,
            transcendentals=0,
            bytes_accessed=4 * (M_p * K_p + K_p * N_p + M_p * N_p)),
    )(lhs_p, rhs_p)

    out = out_p[:M, :C_out].reshape(N, H_out, W_out, C_out)
    return jnp.transpose(out, (0, 3, 1, 2))             # back to NCHW


# ---------------------------------------------------------------------------
# Kernel 2 (withbn=True path): InstanceNorm2d(affine=False) + LeakyReLU(0.2).
# ---------------------------------------------------------------------------
def _instnorm_lrelu_kernel(x_ref, o_ref):
    # Block: (1, TC, HW). Per-(instance, channel) stats over the spatial (lane) axis.
    x = x_ref[...]
    mean = jnp.mean(x, axis=-1, keepdims=True)
    centered = x - mean
    var = jnp.mean(centered * centered, axis=-1, keepdims=True)   # biased variance
    y = centered * lax.rsqrt(var + _EPS)
    o_ref[...] = jnp.where(y >= 0.0, y, _NEG_SLOPE * y)


def _instnorm_lrelu(x_nchw):
    N, C, H, W = x_nchw.shape
    HW = H * W
    x_r = x_nchw.reshape(N, C, HW)
    # Channel tile aligned to the f32 sublane count (8) -> unmasked stores.
    tc = 8 if C % 8 == 0 else C
    out = pl.pallas_call(
        _instnorm_lrelu_kernel,
        out_shape=jax.ShapeDtypeStruct((N, C, HW), x_nchw.dtype),
        grid=(N, C // tc),
        in_specs=[pl.BlockSpec((1, tc, HW), lambda n, c: (n, c, 0))],
        out_specs=pl.BlockSpec((1, tc, HW), lambda n, c: (n, c, 0)),
        compiler_params=pltpu.CompilerParams(
            dimension_semantics=("parallel", "parallel"),
            vmem_limit_bytes=32 * 1024 * 1024),
    )(x_r)
    return out.reshape(N, C, H, W)


# ---------------------------------------------------------------------------
# ConvReLU forward (matches the PyTorch module's forward).
# ---------------------------------------------------------------------------
def conv_relu_forward(x, weight, *, withbn=False):
    if withbn:
        y = _conv3x3_s2(x, weight, apply_relu=False)
        return _instnorm_lrelu(y)
    return _conv3x3_s2(x, weight, apply_relu=True)


def conv_relu_ref(x, weight, *, withbn=False):
    """Pure-JAX reference."""
    y = lax.conv_general_dilated(
        x, weight, window_strides=(2, 2), padding=((1, 1), (1, 1)),
        dimension_numbers=("NCHW", "OIHW", "NCHW"))
    if withbn:
        mean = jnp.mean(y, axis=(2, 3), keepdims=True)
        var = jnp.mean((y - mean) ** 2, axis=(2, 3), keepdims=True)
        y = (y - mean) / jnp.sqrt(var + _EPS)
    return jnp.where(y >= 0.0, y, _NEG_SLOPE * y)


if __name__ == "__main__":
    key = jax.random.PRNGKey(0)
    kx, kw = jax.random.split(key)

    # Small shapes consistent with the module: batch=2, in=8, out=16, 16x16 input.
    N, C_in, H, W = 2, 8, 16, 16
    C_out = 16
    x = jax.random.normal(kx, (N, C_in, H, W), dtype=jnp.float32)
    weight = jax.random.normal(kw, (C_out, C_in, 3, 3), dtype=jnp.float32) * 0.1

    # Default module configuration: withbn=False -> conv + LeakyReLU.
    out = jax.block_until_ready(conv_relu_forward(x, weight, withbn=False))
    ref = conv_relu_ref(x, weight, withbn=False)
    assert out.shape == (N, C_out, H // 2, W // 2)
    # Tolerance accounts for default-precision f32 MXU matmul vs XLA conv.
    assert jnp.allclose(out, ref, atol=2e-2, rtol=2e-2), "mismatch (withbn=False)"

    # withbn=True -> conv + InstanceNorm2d + LeakyReLU.
    out_bn = jax.block_until_ready(conv_relu_forward(x, weight, withbn=True))
    ref_bn = conv_relu_ref(x, weight, withbn=True)
    assert out_bn.shape == ref_bn.shape
    assert jnp.allclose(out_bn, ref_bn, atol=2e-2, rtol=2e-2), "mismatch (withbn=True)"

    print("KERNEL_OK")
</pallas_src>

<mosaic_0001>
module attributes {stable_mosaic.version = 11 : i64} {
  func.func @_conv_gemm_kernel(%arg0: i32, %arg1: i32, %arg2: i32, %arg3: memref<128x128xf32, #tpu.memory_space<vmem>>, %arg4: memref<128x128xf32, #tpu.memory_space<vmem>>, %arg5: memref<128x128xf32, #tpu.memory_space<vmem>>, %arg6: memref<128x128xf32, #tpu.memory_space<vmem>>) attributes {dimension_semantics = [#tpu.dimension_semantics<parallel>, #tpu.dimension_semantics<parallel>, #tpu.dimension_semantics<arbitrary>], iteration_bounds = array<i64: 1, 1, 1>, scalar_prefetch = 0 : i64, scratch_operands = 1 : i64, tpu.core_type = #tpu.core_type<tc>, window_params = [{transform_indices = @transform_0, window_bounds = array<i64: 128, 128>}, {transform_indices = @transform_1, window_bounds = array<i64: 128, 128>}, {transform_indices = @transform_2, window_bounds = array<i64: 128, 128>}]} {
    %c0_i32 = arith.constant 0 : i32
    %0 = arith.cmpi eq, %arg2, %c0_i32 : i32
    %1 = arith.extui %0 : i1 to i32
    %c0_i32_0 = arith.constant 0 : i32
    %2 = arith.cmpi ne, %1, %c0_i32_0 : i32
    scf.if %2 {
      %cst_10 = arith.constant 0.000000e+00 : f32
      %12 = vector.broadcast %cst_10 : f32 to vector<128x128xf32>
      %c0_11 = arith.constant 0 : index
      %c0_12 = arith.constant 0 : index
      %13 = vector.load %arg6[%c0_11, %c0_12] : memref<128x128xf32, #tpu.memory_space<vmem>>, vector<128x128xf32>
      tpu.vector_store %arg6[%c0_11, %c0_12], %12 {strides = array<i32>} : memref<128x128xf32, #tpu.memory_space<vmem>>, vector<128x128xf32>,
    } else {
    }
    %c0 = arith.constant 0 : index
    %c0_1 = arith.constant 0 : index
    %3 = vector.load %arg6[%c0, %c0_1] : memref<128x128xf32, #tpu.memory_space<vmem>>, vector<128x128xf32>
    %c0_2 = arith.constant 0 : index
    %c0_3 = arith.constant 0 : index
    %4 = vector.load %arg3[%c0_2, %c0_3] : memref<128x128xf32, #tpu.memory_space<vmem>>, vector<128x128xf32>
    %c0_4 = arith.constant 0 : index
    %c0_5 = arith.constant 0 : index
    %5 = vector.load %arg4[%c0_4, %c0_5] : memref<128x128xf32, #tpu.memory_space<vmem>>, vector<128x128xf32>
    %cst = arith.constant dense<0.000000e+00> : vector<128x128xf32>
    %6 = tpu.matmul %4, %5, %cst {dimension_numbers = #tpu.dot_dimension_numbers<[1], [0], [0], [1], [0, 0, 1, 1], [], []>} : vector<128x128xf32>, vector<128x128xf32>, vector<128x128xf32> -> vector<128x128xf32>
    %7 = arith.addf %3, %6 : vector<128x128xf32>
    %c0_6 = arith.constant 0 : index
    %c0_7 = arith.constant 0 : index
    %8 = vector.load %arg6[%c0_6, %c0_7] : memref<128x128xf32, #tpu.memory_space<vmem>>, vector<128x128xf32>
    tpu.vector_store %arg6[%c0_6, %c0_7], %7 {strides = array<i32>} : memref<128x128xf32, #tpu.memory_space<vmem>>, vector<128x128xf32>,
    %c0_i32_8 = arith.constant 0 : i32
    %9 = arith.cmpi eq, %arg2, %c0_i32_8 : i32
    %10 = arith.extui %9 : i1 to i32
    %c0_i32_9 = arith.constant 0 : i32
    %11 = arith.cmpi ne, %10, %c0_i32_9 : i32
    scf.if %11 {
      %c0_10 = arith.constant 0 : index
      %c0_11 = arith.constant 0 : index
      %12 = vector.load %arg6[%c0_10, %c0_11] : memref<128x128xf32, #tpu.memory_space<vmem>>, vector<128x128xf32>
      %cst_12 = arith.constant 0.000000e+00 : f32
      %13 = vector.broadcast %cst_12 : f32 to vector<128x128xf32>
      %14 = arith.cmpf oge, %12, %13 : vector<128x128xf32>
      %cst_13 = arith.constant 2.000000e-01 : f32
      %15 = vector.broadcast %cst_13 : f32 to vector<128x128xf32>
      %16 = arith.mulf %15, %12 : vector<128x128xf32>
      %17 = arith.select %14, %12, %16 : vector<128x128xi1>, vector<128x128xf32>
      %c0_14 = arith.constant 0 : index
      %c0_15 = arith.constant 0 : index
      %18 = vector.load %arg5[%c0_14, %c0_15] : memref<128x128xf32, #tpu.memory_space<vmem>>, vector<128x128xf32>
      tpu.vector_store %arg5[%c0_14, %c0_15], %17 {strides = array<i32>} : memref<128x128xf32, #tpu.memory_space<vmem>>, vector<128x128xf32>,
    } else {
    }
    return
  }
  func.func @transform_0(%arg0: i32, %arg1: i32, %arg2: i32) -> (i32, i32) {
    %c0_i32 = arith.constant 0 : i32
    return %arg0, %arg2 : i32, i32
  }
  func.func @transform_1(%arg0: i32, %arg1: i32, %arg2: i32) -> (i32, i32) {
    %c0_i32 = arith.constant 0 : i32
    return %arg2, %arg1 : i32, i32
  }
  func.func @transform_2(%arg0: i32, %arg1: i32, %arg2: i32) -> (i32, i32) {
    %c0_i32 = arith.constant 0 : i32
    return %arg0, %arg1 : i32, i32
  }
}

</mosaic_0001>

<llo_original>
// kernel: tpu_custom_call.1
$region0: #{tpu_custom_call.1}
  #allocation0 [shape = 'u32[]', space=smem, size = 0x4, offset = 0x4, fixed_abs, tag = 'smem constant byte address 0x4 - core index']
  #allocation1 [shape = 'u32[72,128]{1,0:T(1,128)}', space=vmem, size = 0x9000, scoped, tag = 'internal scratch']
  #allocation2 [shape = 'f32[128,128]{1,0:T(8,128)}', space=vmem, size = 0x10000, scoped, tag = 'scratch operand']
  %s0 = inlined_call_operand.hbm [shape: f32[128,128], index: 0, kind: input, shape index: {}]
  %s1 = inlined_call_operand.hbm [shape: f32[128,128], index: 1, kind: input, shape index: {}]
  %s2 = inlined_call_operand.hbm [shape: f32[128,128], index: 2, kind: output, shape index: {}]
  %s3 = sld [smem:[#allocation0]]
  $region34: #{tpu_custom_call.1} parent=0
    _
  %s5 = ssub.s32 1, %s3
  %s6 = scalar_select 0, %s5, %s3
  $region1: #{tpu_custom_call.1} parent=0
    #allocation3 [shape = 'u8[65536]{0}', space=vmem, size = 0x10000, scoped, tag = 'input window, operand 0, single buffered']
    #allocation4 [shape = 's32[1]{0}', space=sflag, size = 0x4, scoped, tag = 'scoped memory for tpu_custom_call.1']
    #allocation5 [shape = 's32[1]{0}', space=sflag, size = 0x4, scoped, tag = 'scoped memory for tpu_custom_call.1']
    #allocation6 [shape = 'u8[65536]{0}', space=vmem, size = 0x10000, scoped, tag = 'input window, operand 1, single buffered']
    #allocation7 [shape = 's32[1]{0}', space=sflag, size = 0x4, scoped, tag = 'scoped memory for tpu_custom_call.1']
    #allocation8 [shape = 'u8[65536]{0}', space=vmem, size = 0x10000, scoped, tag = 'output window, operand 0, single buffered']
    %7 = vsyncpa [#allocation4], 0
    %8 = vsyncpa [#allocation7], 0
    %9 = vsyncpa [#allocation5], 0
    // Predicated region
    $region2: #{tpu_custom_call.1} parent=1 // pred_check
      _
    $region3: #{tpu_custom_call.1} parent=1 // pred_check_branch
      %11 = sbr.rel (0) target = $region5
    $region4: #{tpu_custom_call.1} parent=1 // pred_region
      %13 = vsyncadd [#allocation4], 0
      %s14 = sshll.u32 %s0, 4
      %s15 = int_to_ptr.hbm [resolvable:$true] %s14
      %s16 = sshll.u32 [#allocation3], 4
      %s17 = int_to_ptr.vmem [resolvable:$true] %s16
      %22 = dma.hbm_to_vmem [thread:$0]  %s15, 2048, %s17, [#allocation4], 128, 128, 8
    $region5: #{tpu_custom_call.1} parent=1 // pred_fallthru
      _
    // Predicated region
    $region6: #{tpu_custom_call.1} parent=1 // pred_check
      _
    $region7: #{tpu_custom_call.1} parent=1 // pred_check_branch
      %24 = sbr.rel (0) target = $region9
    $region8: #{tpu_custom_call.1} parent=1 // pred_region
      %26 = vsyncadd [#allocation7], 0
      %s27 = sshll.u32 %s1, 4
      %s28 = int_to_ptr.hbm [resolvable:$true] %s27
      %s29 = sshll.u32 [#allocation6], 4
      %s30 = int_to_ptr.vmem [resolvable:$true] %s29
      %35 = dma.hbm_to_vmem [thread:$0]  %s28, 2048, %s30, [#allocation7], 128, 128, 8
    $region9: #{tpu_custom_call.1} parent=1 // pred_fallthru
      _
    // Predicated region
    $region10: #{tpu_custom_call.1} parent=1 // pred_check
      _
    $region11: #{tpu_custom_call.1} parent=1 // pred_check_branch
      %37 = sbr.rel (0) target = $region13
    $region12: #{tpu_custom_call.1} parent=1 // pred_region
      %39 = dma.done [#allocation4], 2048
    $region13: #{tpu_custom_call.1} parent=1 // pred_fallthru
      _
    // Predicated region
    $region14: #{tpu_custom_call.1} parent=1 // pred_check
      _
    $region15: #{tpu_custom_call.1} parent=1 // pred_check_branch
      %41 = sbr.rel (0) target = $region17
    $region16: #{tpu_custom_call.1} parent=1 // pred_region
      %43 = dma.done [#allocation7], 2048
    $region17: #{tpu_custom_call.1} parent=1 // pred_fallthru
      _
    %p44 = scmp.eq.s32.totalorder 0, 0
    // Predicated region
    $region18: #{tpu_custom_call.1} parent=1 // pred_check
      %p45 = pneg %p44
    $region19: #{tpu_custom_call.1} parent=1 // pred_check_branch
      %47 = sbr.rel (%p45) target = $region21
    $region20: #{tpu_custom_call.1} parent=1 // pred_region
      %48 = vst [vmem:[#allocation2] sm:$0xff] 0.0
      %49 = vst [vmem:[#allocation2 + $0x8] sm:$0xff] 0.0
      %50 = vst [vmem:[#allocation2 + $0x10] sm:$0xff] 0.0
      %51 = vst [vmem:[#allocation2 + $0x18] sm:$0xff] 0.0
      %52 = vst [vmem:[#allocation2 + $0x20] sm:$0xff] 0.0
      %53 = vst [vmem:[#allocation2 + $0x28] sm:$0xff] 0.0
      %54 = vst [vmem:[#allocation2 + $0x30] sm:$0xff] 0.0
      %55 = vst [vmem:[#allocation2 + $0x38] sm:$0xff] 0.0
      %56 = vst [vmem:[#allocation2 + $0x40] sm:$0xff] 0.0
      %57 = vst [vmem:[#allocation2 + $0x48] sm:$0xff] 0.0
      %58 = vst [vmem:[#allocation2 + $0x50] sm:$0xff] 0.0
      %59 = vst [vmem:[#allocation2 + $0x58] sm:$0xff] 0.0
      %60 = vst [vmem:[#allocation2 + $0x60] sm:$0xff] 0.0
      %61 = vst [vmem:[#allocation2 + $0x68] sm:$0xff] 0.0
      %62 = vst [vmem:[#allocation2 + $0x70] sm:$0xff] 0.0
      %63 = vst [vmem:[#allocation2 + $0x78] sm:$0xff] 0.0
    $region21: #{tpu_custom_call.1} parent=1 // pred_fallthru
      _
    %v64 = vld [vmem:[#allocation2] sm:$0xff]
    %v65 = vld [vmem:[#allocation2 + $0x8] sm:$0xff]
    %v66 = vld [vmem:[#allocation2 + $0x10] sm:$0xff]
    %v67 = vld [vmem:[#allocation2 + $0x18] sm:$0xff]
    %v68 = vld [vmem:[#allocation2 + $0x20] sm:$0xff]
    %v69 = vld [vmem:[#allocation2 + $0x28] sm:$0xff]
    %v70 = vld [vmem:[#allocation2 + $0x30] sm:$0xff]
    %v71 = vld [vmem:[#allocation2 + $0x38] sm:$0xff]
    %v72 = vld [vmem:[#allocation2 + $0x40] sm:$0xff]
    %v73 = vld [vmem:[#allocation2 + $0x48] sm:$0xff]
    %v74 = vld [vmem:[#allocation2 + $0x50] sm:$0xff]
    %v75 = vld [vmem:[#allocation2 + $0x58] sm:$0xff]
    %v76 = vld [vmem:[#allocation2 + $0x60] sm:$0xff]
    %v77 = vld [vmem:[#allocation2 + $0x68] sm:$0xff]
    %v78 = vld [vmem:[#allocation2 + $0x70] sm:$0xff]
    %v79 = vld [vmem:[#allocation2 + $0x78] sm:$0xff]
    %v80 = vld [vmem:[#allocation3] sm:$0xff]
    %v81 = vld [vmem:[#allocation3 + $0x8] sm:$0xff]
    %v82 = vld [vmem:[#allocation3 + $0x10] sm:$0xff]
    %v83 = vld [vmem:[#allocation3 + $0x18] sm:$0xff]
    %v84 = vld [vmem:[#allocation3 + $0x20] sm:$0xff]
    %v85 = vld [vmem:[#allocation3 + $0x28] sm:$0xff]
    %v86 = vld [vmem:[#allocation3 + $0x30] sm:$0xff]
    %v87 = vld [vmem:[#allocation3 + $0x38] sm:$0xff]
    %v88 = vld [vmem:[#allocation3 + $0x40] sm:$0xff]
    %v89 = vld [vmem:[#allocation3 + $0x48] sm:$0xff]
    %v90 = vld [vmem:[#allocation3 + $0x50] sm:$0xff]
    %v91 = vld [vmem:[#allocation3 + $0x58] sm:$0xff]
    %v92 = vld [vmem:[#allocation3 + $0x60] sm:$0xff]
    %v93 = vld [vmem:[#allocation3 + $0x68] sm:$0xff]
    %v94 = vld [vmem:[#allocation3 + $0x70] sm:$0xff]
    %v95 = vld [vmem:[#allocation3 + $0x78] sm:$0xff]
    %v96 = vld [vmem:[#allocation6] sm:$0xff]
    %v97 = vld [vmem:[#allocation6 + $0x8] sm:$0xff]
    %v98 = vld [vmem:[#allocation6 + $0x10] sm:$0xff]
    %v99 = vld [vmem:[#allocation6 + $0x18] sm:$0xff]
    %v100 = vld [vmem:[#allocation6 + $0x20] sm:$0xff]
    %v101 = vld [vmem:[#allocation6 + $0x28] sm:$0xff]
    %v102 = vld [vmem:[#allocation6 + $0x30] sm:$0xff]
    %v103 = vld [vmem:[#allocation6 + $0x38] sm:$0xff]
    %v104 = vld [vmem:[#allocation6 + $0x40] sm:$0xff]
    %v105 = vld [vmem:[#allocation6 + $0x48] sm:$0xff]
    %v106 = vld [vmem:[#allocation6 + $0x50] sm:$0xff]
    %v107 = vld [vmem:[#allocation6 + $0x58] sm:$0xff]
    %v108 = vld [vmem:[#allocation6 + $0x60] sm:$0xff]
    %v109 = vld [vmem:[#allocation6 + $0x68] sm:$0xff]
    %v110 = vld [vmem:[#allocation6 + $0x70] sm:$0xff]
    %v111 = vld [vmem:[#allocation6 + $0x78] sm:$0xff]
    %112 = vmatpush.msra.mxu0 %v111
    %113 = vmatpush.msra.mxu0 %v110
    %114 = vmatpush.msra.mxu0 %v109
    %115 = vmatpush.msra.mxu0 %v108
    %116 = vmatpush.msra.mxu0 %v107
    %117 = vmatpush.msra.mxu0 %v106
    %118 = vmatpush.msra.mxu0 %v105
    %119 = vmatpush.msra.mxu0 %v104
    %120 = vmatpush.msra.mxu0 %v103
    %121 = vmatpush.msra.mxu0 %v102
    %122 = vmatpush.msra.mxu0 %v101
    %123 = vmatpush.msra.mxu0 %v100
    %124 = vmatpush.msra.mxu0 %v99
    %125 = vmatpush.msra.mxu0 %v98
    %126 = vmatpush.msra.mxu0 %v97
    %127 = vmatpush.msra.mxu0 %v96
    %128 = vmatmul.f32.gmra.mxu0 %v80
    %v129 = vpop.f32.mrf.mxu0
    %v130 = vadd.f32 0.0, %v129
    %131 = vmatmul.f32.gmra.mxu0 %v81
    %v132 = vpop.f32.mrf.mxu0
    %v133 = vadd.f32 0.0, %v132
    %134 = vmatmul.f32.gmra.mxu0 %v82
    %v135 = vpop.f32.mrf.mxu0
    %v136 = vadd.f32 0.0, %v135
    %137 = vmatmul.f32.gmra.mxu0 %v83
    %v138 = vpop.f32.mrf.mxu0
    %v139 = vadd.f32 0.0, %v138
    %140 = vmatmul.f32.gmra.mxu0 %v84
    %v141 = vpop.f32.mrf.mxu0
    %v142 = vadd.f32 0.0, %v141
    %143 = vmatmul.f32.gmra.mxu0 %v85
    %v144 = vpop.f32.mrf.mxu0
    %v145 = vadd.f32 0.0, %v144
    %146 = vmatmul.f32.gmra.mxu0 %v86
    %v147 = vpop.f32.mrf.mxu0
    %v148 = vadd.f32 0.0, %v147
    %149 = vmatmul.f32.gmra.mxu0 %v87
    %v150 = vpop.f32.mrf.mxu0
    %v151 = vadd.f32 0.0, %v150
    %152 = vmatmul.f32.gmra.mxu0 %v88
    %v153 = vpop.f32.mrf.mxu0
    %v154 = vadd.f32 0.0, %v153
    %155 = vmatmul.f32.gmra.mxu0 %v89
    %v156 = vpop.f32.mrf.mxu0
    %v157 = vadd.f32 0.0, %v156
    %158 = vmatmul.f32.gmra.mxu0 %v90
    %v159 = vpop.f32.mrf.mxu0
    %v160 = vadd.f32 0.0, %v159
    %161 = vmatmul.f32.gmra.mxu0 %v91
    %v162 = vpop.f32.mrf.mxu0
    %v163 = vadd.f32 0.0, %v162
    %164 = vmatmul.f32.gmra.mxu0 %v92
    %v165 = vpop.f32.mrf.mxu0
    %v166 = vadd.f32 0.0, %v165
    %167 = vmatmul.f32.gmra.mxu0 %v93
    %v168 = vpop.f32.mrf.mxu0
    %v169 = vadd.f32 0.0, %v168
    %170 = vmatmul.f32.gmra.mxu0 %v94
    %v171 = vpop.f32.mrf.mxu0
    %v172 = vadd.f32 0.0, %v171
    %173 = vmatmul.f32.gmra.mxu0 %v95
    %v174 = vpop.f32.mrf.mxu0
    %v175 = vadd.f32 0.0, %v174
    %176 = vdwg.mxu0
    %v177 = vadd.f32 %v64, %v130
    %v178 = vadd.f32 %v65, %v133
    %v179 = vadd.f32 %v66, %v136
    %v180 = vadd.f32 %v67, %v139
    %v181 = vadd.f32 %v68, %v142
    %v182 = vadd.f32 %v69, %v145
    %v183 = vadd.f32 %v70, %v148
    %v184 = vadd.f32 %v71, %v151
    %v185 = vadd.f32 %v72, %v154
    %v186 = vadd.f32 %v73, %v157
    %v187 = vadd.f32 %v74, %v160
    %v188 = vadd.f32 %v75, %v163
    %v189 = vadd.f32 %v76, %v166
    %v190 = vadd.f32 %v77, %v169
    %v191 = vadd.f32 %v78, %v172
    %v192 = vadd.f32 %v79, %v175
    %193 = vst [vmem:[#allocation2] sm:$0xff] %v177
    %194 = vst [vmem:[#allocation2 + $0x8] sm:$0xff] %v178
    %195 = vst [vmem:[#allocation2 + $0x10] sm:$0xff] %v179
    %196 = vst [vmem:[#allocation2 + $0x18] sm:$0xff] %v180
    %197 = vst [vmem:[#allocation2 + $0x20] sm:$0xff] %v181
    %198 = vst [vmem:[#allocation2 + $0x28] sm:$0xff] %v182
    %199 = vst [vmem:[#allocation2 + $0x30] sm:$0xff] %v183
    %200 = vst [vmem:[#allocation2 + $0x38] sm:$0xff] %v184
    %201 = vst [vmem:[#allocation2 + $0x40] sm:$0xff] %v185
    %202 = vst [vmem:[#allocation2 + $0x48] sm:$0xff] %v186
    %203 = vst [vmem:[#allocation2 + $0x50] sm:$0xff] %v187
    %204 = vst [vmem:[#allocation2 + $0x58] sm:$0xff] %v188
    %205 = vst [vmem:[#allocation2 + $0x60] sm:$0xff] %v189
    %206 = vst [vmem:[#allocation2 + $0x68] sm:$0xff] %v190
    %207 = vst [vmem:[#allocation2 + $0x70] sm:$0xff] %v191
    %208 = vst [vmem:[#allocation2 + $0x78] sm:$0xff] %v192
    // Predicated region
    $region22: #{tpu_custom_call.1} parent=1 // pred_check
      %p209 = pneg %p44
    $region23: #{tpu_custom_call.1} parent=1 // pred_check_branch
      %211 = sbr.rel (%p209) target = $region25
    $region24: #{tpu_custom_call.1} parent=1 // pred_region
      %v212 = vld [vmem:[#allocation2] sm:$0xff]
      %v213 = vld [vmem:[#allocation2 + $0x8] sm:$0xff]
      %v214 = vld [vmem:[#allocation2 + $0x10] sm:$0xff]
      %v215 = vld [vmem:[#allocation2 + $0x18] sm:$0xff]
      %v216 = vld [vmem:[#allocation2 + $0x20] sm:$0xff]
      %v217 = vld [vmem:[#allocation2 + $0x28] sm:$0xff]
      %v218 = vld [vmem:[#allocation2 + $0x30] sm:$0xff]
      %v219 = vld [vmem:[#allocation2 + $0x38] sm:$0xff]
      %v220 = vld [vmem:[#allocation2 + $0x40] sm:$0xff]
      %v221 = vld [vmem:[#allocation2 + $0x48] sm:$0xff]
      %v222 = vld [vmem:[#allocation2 + $0x50] sm:$0xff]
      %v223 = vld [vmem:[#allocation2 + $0x58] sm:$0xff]
      %v224 = vld [vmem:[#allocation2 + $0x60] sm:$0xff]
      %v225 = vld [vmem:[#allocation2 + $0x68] sm:$0xff]
      %v226 = vld [vmem:[#allocation2 + $0x70] sm:$0xff]
      %v227 = vld [vmem:[#allocation2 + $0x78] sm:$0xff]
      %vm228 = vcmp.ge.f32.partialorder %v212, 0.0
      %vm229 = vcmp.ge.f32.partialorder %v213, 0.0
      %vm230 = vcmp.ge.f32.partialorder %v214, 0.0
      %vm231 = vcmp.ge.f32.partialorder %v215, 0.0
      %vm232 = vcmp.ge.f32.partialorder %v216, 0.0
      %vm233 = vcmp.ge.f32.partialorder %v217, 0.0
      %vm234 = vcmp.ge.f32.partialorder %v218, 0.0
      %vm235 = vcmp.ge.f32.partialorder %v219, 0.0
      %vm236 = vcmp.ge.f32.partialorder %v220, 0.0
      %vm237 = vcmp.ge.f32.partialorder %v221, 0.0
      %vm238 = vcmp.ge.f32.partialorder %v222, 0.0
      %vm239 = vcmp.ge.f32.partialorder %v223, 0.0
      %vm240 = vcmp.ge.f32.partialorder %v224, 0.0
      %vm241 = vcmp.ge.f32.partialorder %v225, 0.0
      %vm242 = vcmp.ge.f32.partialorder %v226, 0.0
      %vm243 = vcmp.ge.f32.partialorder %v227, 0.0
      %v244 = vmul.f32 %v212, 0.2
      %v245 = vmul.f32 %v213, 0.2
      %v246 = vmul.f32 %v214, 0.2
      %v247 = vmul.f32 %v215, 0.2
      %v248 = vmul.f32 %v216, 0.2
      %v249 = vmul.f32 %v217, 0.2
      %v250 = vmul.f32 %v218, 0.2
      %v251 = vmul.f32 %v219, 0.2
      %v252 = vmul.f32 %v220, 0.2
      %v253 = vmul.f32 %v221, 0.2
      %v254 = vmul.f32 %v222, 0.2
      %v255 = vmul.f32 %v223, 0.2
      %v256 = vmul.f32 %v224, 0.2
      %v257 = vmul.f32 %v225, 0.2
      %v258 = vmul.f32 %v226, 0.2
      %v259 = vmul.f32 %v227, 0.2
      %v260 = vsel %vm228, %v212, %v244
      %v261 = vsel %vm229, %v213, %v245
      %v262 = vsel %vm230, %v214, %v246
      %v263 = vsel %vm231, %v215, %v247
      %v264 = vsel %vm232, %v216, %v248
      %v265 = vsel %vm233, %v217, %v249
      %v266 = vsel %vm234, %v218, %v250
      %v267 = vsel %vm235, %v219, %v251
      %v268 = vsel %vm236, %v220, %v252
      %v269 = vsel %vm237, %v221, %v253
      %v270 = vsel %vm238, %v222, %v254
      %v271 = vsel %vm239, %v223, %v255
      %v272 = vsel %vm240, %v224, %v256
      %v273 = vsel %vm241, %v225, %v257
      %v274 = vsel %vm242, %v226, %v258
      %v275 = vsel %vm243, %v227, %v259
      %276 = vst [vmem:[#allocation8] sm:$0xff] %v260
      %277 = vst [vmem:[#allocation8 + $0x8] sm:$0xff] %v261
      %278 = vst [vmem:[#allocation8 + $0x10] sm:$0xff] %v262
      %279 = vst [vmem:[#allocation8 + $0x18] sm:$0xff] %v263
      %280 = vst [vmem:[#allocation8 + $0x20] sm:$0xff] %v264
      %281 = vst [vmem:[#allocation8 + $0x28] sm:$0xff] %v265
      %282 = vst [vmem:[#allocation8 + $0x30] sm:$0xff] %v266
      %283 = vst [vmem:[#allocation8 + $0x38] sm:$0xff] %v267
      %284 = vst [vmem:[#allocation8 + $0x40] sm:$0xff] %v268
      %285 = vst [vmem:[#allocation8 + $0x48] sm:$0xff] %v269
      %286 = vst [vmem:[#allocation8 + $0x50] sm:$0xff] %v270
      %287 = vst [vmem:[#allocation8 + $0x58] sm:$0xff] %v271
      %288 = vst [vmem:[#allocation8 + $0x60] sm:$0xff] %v272
      %289 = vst [vmem:[#allocation8 + $0x68] sm:$0xff] %v273
      %290 = vst [vmem:[#allocation8 + $0x70] sm:$0xff] %v274
      %291 = vst [vmem:[#allocation8 + $0x78] sm:$0xff] %v275
    $region25: #{tpu_custom_call.1} parent=1 // pred_fallthru
      _
    // Predicated region
    $region26: #{tpu_custom_call.1} parent=1 // pred_check
      _
    $region27: #{tpu_custom_call.1} parent=1 // pred_check_branch
      %293 = sbr.rel (0) target = $region29
    $region28: #{tpu_custom_call.1} parent=1 // pred_region
      %295 = vsyncadd [#allocation5], 0
      %s296 = sshll.u32 [#allocation8], 4
      %s297 = int_to_ptr.vmem [resolvable:$true] %s296
      %s298 = sshll.u32 %s2, 4
      %s299 = int_to_ptr.hbm [resolvable:$true] %s298
      %304 = dma.vmem_to_hbm [thread:$0]  %s297, 2048, %s299, [#allocation5], 128, 128, 8
    $region29: #{tpu_custom_call.1} parent=1 // pred_fallthru
      _
    // Predicated region
    $region30: #{tpu_custom_call.1} parent=1 // pred_check
      _
    $region31: #{tpu_custom_call.1} parent=1 // pred_check_branch
      %306 = sbr.rel (0) target = $region33
    $region32: #{tpu_custom_call.1} parent=1 // pred_region
      %308 = dma.done [#allocation5], 2048
    $region33: #{tpu_custom_call.1} parent=1 // pred_fallthru
      _
    %309 = vsyncpa [#allocation4], 1
    %310 = vsyncpa [#allocation7], 1
    %311 = vsyncpa [#allocation5], 1

</llo_original>
